<compile_context>
chip_gen: v5e
topology: v5e:2x2
jax: 0.10.0
libtpu: 0.0.40
codegen_flags: <defaults>
</compile_context>

<pallas_src>
import functools

import jax
import jax.numpy as jnp
import numpy as np
from jax.experimental import pallas as pl
from jax.experimental.pallas import tpu as pltpu

LANE = 128
MAX_TILE_R = 8192          # (8192,128) f32 block = 4 MiB; 16 MiB double-buffered x2 inputs
VMEM_BUDGET_CAP = 32 * 1024 * 1024   # fits v5e/v6e (128 MiB) and v7x (64 MiB) with headroom


def _round_up(x, m):
    return ((x + m - 1) // m) * m


def _vmem_capacity_bytes():
    """Best-effort per-generation VMEM capacity; conservative fallback (v7x)."""
    try:
        cap = getattr(pltpu.get_tpu_info(), "vmem_capacity_bytes", None)
        if cap:
            return int(cap)
    except Exception:
        pass
    return 64 * 1024 * 1024


def _num_tensorcores():
    """Best-effort TensorCore count per device; fall back to 1 (v5e/v6e-safe).

    A wrong '2' on a 1-TC part only costs at most one duplicated (skipped-
    compute) DMA step, since the tile set is partitioned, not replicated.
    """
    try:
        info = pltpu.get_tpu_info()
        for name in ("num_cores", "core_count", "num_tensorcores",
                     "tensorcore_count", "cores_per_chip"):
            val = getattr(info, name, None)
            if isinstance(val, (int, np.integer)) and val >= 1:
                return int(min(int(val), 2))
    except Exception:
        pass
    return 1


def _qfocal_elementwise(x, y, gamma, alpha, *, use_approx_recip):
    """Stable per-element quality-focal loss (shared by kernel and JAX tail)."""
    e = jnp.exp(-jnp.abs(x))                      # in (0, 1]
    if use_approx_recip:
        inv = pl.reciprocal(1.0 + e, approx=True)  # single EUP vrcp push
    else:
        inv = 1.0 / (1.0 + e)
    pred_prob = jnp.where(x >= 0.0, inv, e * inv)  # numerically stable sigmoid(x)

    # BCEWithLogitsLoss(reduction='none'): max(x,0) - x*y + log1p(exp(-|x|))
    bce = jnp.maximum(x, 0.0) - x * y + jnp.log1p(e)

    alpha_factor = y * alpha + (1.0 - y) * (1.0 - alpha)
    d = jnp.abs(y - pred_prob)
    if gamma == 1.5:
        modulating = d * jnp.sqrt(d)               # exact d**1.5, no log(0) path
    elif gamma == 2.0:
        modulating = d * d
    elif gamma == 1.0:
        modulating = d
    else:
        safe_d = jnp.where(d > 0.0, d, 1.0)        # avoid exp(gamma*log(0))
        modulating = jnp.where(d > 0.0, safe_d ** gamma, 0.0)
    return bce * alpha_factor * modulating


def _qfocal_kernel(pred_ref, true_ref, out_ref, *,
                   gamma, alpha, num_tiles, tiles_per_core,
                   rows_last_tile, needs_row_mask, has_padded_steps):
    c = pl.program_id(0)            # core / partial-sum index ("parallel")
    j = pl.program_id(1)            # tile index within this core ("arbitrary")
    t = c * tiles_per_core + j      # global tile index

    # out_ref is this core's (8,128) partial-sum block, resident across j.
    @pl.when(j == 0)
    def _():
        out_ref[...] = jnp.zeros_like(out_ref)

    def accumulate(mask_rows):
        x = pred_ref[...].astype(jnp.float32)
        y = true_ref[...].astype(jnp.float32)
        loss = _qfocal_elementwise(x, y, gamma, alpha, use_approx_recip=True)
        if mask_rows:
            # Only Pallas row overhang remains (lanes are exact by construction).
            row_id = jax.lax.broadcasted_iota(jnp.int32, loss.shape, 0)
            loss = jnp.where(row_id < rows_last_tile, loss, 0.0)
        # Fold (tile_r,128) -> (tile_r//8, 8, 128) and sum the major axis:
        # vreg-aligned VALU adds only; keeps the accumulator at one vreg.
        tile_r = loss.shape[0]
        out_ref[...] += loss.reshape(tile_r // 8, 8, LANE).sum(axis=0)

    if needs_row_mask:
        @pl.when(t < num_tiles - 1)
        def _():
            accumulate(False)

        @pl.when(t == num_tiles - 1)
        def _():
            accumulate(True)
    elif has_padded_steps:
        # Clamped duplicate steps (t >= num_tiles) only pay their DMA.
        @pl.when(t < num_tiles)
        def _():
            accumulate(False)
    else:
        accumulate(False)


def qfocal_loss(pred, true, gamma=1.5, alpha=0.25, reduction="mean",
                max_tile_r=None):
    """Quality Focal Loss with a BCEWithLogitsLoss base ('mean' / 'sum')."""
    assert pred.shape == true.shape
    total = int(np.prod(pred.shape))
    assert total > 0
    # TODO(synk): reduction='none' (elementwise, unreduced output) not implemented here.
    assert reduction in ("mean", "sum")

    gamma = float(gamma)
    alpha = float(alpha)

    flat_p = pred.reshape(-1)
    flat_t = true.reshape(-1)
    rows = total // LANE
    rem = total - rows * LANE

    # Ragged (<128 element) tail: tiny plain-JAX sum — no full-array pad copy.
    if rem:
        tail = jnp.sum(_qfocal_elementwise(
            flat_p[rows * LANE:].astype(jnp.float32),
            flat_t[rows * LANE:].astype(jnp.float32),
            gamma, alpha, use_approx_recip=False))
    else:
        tail = jnp.float32(0.0)

    if rows == 0:
        total_loss = tail
    else:
        if rem:
            p2d = flat_p[: rows * LANE].reshape(rows, LANE)
            t2d = flat_t[: rows * LANE].reshape(rows, LANE)
        else:
            p2d = flat_p.reshape(rows, LANE)      # free reshape, common case
            t2d = flat_t.reshape(rows, LANE)

        # Tile sizing: biggest block that fits the cross-generation VMEM budget
        # (2 inputs x 2 pipeline buffers per block + the tiny (8,128) output).
        itemsize = max(np.dtype(pred.dtype).itemsize, np.dtype(true.dtype).itemsize)
        vmem_budget = int(min(VMEM_BUDGET_CAP, _vmem_capacity_bytes() // 2))
        if max_tile_r is None:
            budget_rows = (vmem_budget - (2 << 20)) // (4 * LANE * itemsize)
            max_tile_r = min(MAX_TILE_R, budget_rows)
        tile_r = max(8, min(int(max_tile_r), _round_up(rows, 8)))
        tile_r = (tile_r // 8) * 8

        num_tiles = pl.cdiv(rows, tile_r)
        num_cores = max(1, min(_num_tensorcores(), num_tiles))
        tiles_per_core = pl.cdiv(num_tiles, num_cores)
        rows_last_tile = rows - (num_tiles - 1) * tile_r
        needs_row_mask = rows_last_tile < tile_r
        has_padded_steps = num_cores * tiles_per_core > num_tiles

        kernel = functools.partial(
            _qfocal_kernel,
            gamma=gamma, alpha=alpha,
            num_tiles=num_tiles, tiles_per_core=tiles_per_core,
            rows_last_tile=rows_last_tile,
            needs_row_mask=needs_row_mask,
            has_padded_steps=has_padded_steps,
        )

        def in_map(c, j):
            # Clamp so the padded core's trailing step stays in-bounds; its
            # contribution is suppressed inside the kernel.
            return (jnp.minimum(c * tiles_per_core + j, num_tiles - 1), 0)

        partials = pl.pallas_call(
            kernel,
            out_shape=jax.ShapeDtypeStruct((num_cores * 8, LANE), jnp.float32),
            grid_spec=pltpu.PrefetchScalarGridSpec(
                num_scalar_prefetch=0,
                grid=(num_cores, tiles_per_core),
                in_specs=[
                    pl.BlockSpec((tile_r, LANE), in_map),
                    pl.BlockSpec((tile_r, LANE), in_map),
                ],
                # Per-core (8,128) partial sum doubles as the accumulator
                # (block index depends only on c -> resident across j).
                out_specs=pl.BlockSpec((8, LANE), lambda c, j: (c, 0)),
            ),
            compiler_params=pltpu.CompilerParams(
                dimension_semantics=("parallel", "arbitrary"),
                vmem_limit_bytes=vmem_budget,
            ),
        )(p2d, t2d)

        total_loss = jnp.sum(partials) + tail

    if reduction == "mean":
        return total_loss / jnp.float32(total)
    return total_loss


def _qfocal_ref(pred, true, gamma=1.5, alpha=0.25):
    x = pred.astype(jnp.float32)
    y = true.astype(jnp.float32)
    bce = jnp.maximum(x, 0.0) - x * y + jnp.log1p(jnp.exp(-jnp.abs(x)))
    p = jax.nn.sigmoid(x)
    af = y * alpha + (1.0 - y) * (1.0 - alpha)
    mf = jnp.abs(y - p) ** gamma
    return jnp.mean(bce * af * mf)


if __name__ == "__main__":
    key = jax.random.PRNGKey(0)

    # Small deterministic checks:
    #  1) YOLO-style NCHW logits, single tile, exact 128-multiple.
    #  2) Non-128-multiple total -> plain-JAX tail + Pallas row-overhang mask.
    #  3) Forced small tile -> multi-tile accumulation + last-tile row mask
    #     (+ one clamped duplicate step if 2 TensorCores are detected).
    checks = [
        dict(shape=(2, 4, 16, 16), max_tile_r=None),   # 2048 elems
        dict(shape=(2, 3, 19, 16), max_tile_r=None),   # 1824 elems
        dict(shape=(2, 8, 20, 20), max_tile_r=8),      # 6400 elems, 7 tiles
    ]
    result = None
    for cfg in checks:
        key, k1, k2 = jax.random.split(key, 3)
        pred = jax.random.normal(k1, cfg["shape"], dtype=jnp.float32) * 2.0
        true = (jax.random.uniform(k2, cfg["shape"]) > 0.8).astype(jnp.float32)

        out = qfocal_loss(pred, true, gamma=1.5, alpha=0.25,
                          max_tile_r=cfg["max_tile_r"])
        out = jax.block_until_ready(out)
        ref = _qfocal_ref(pred, true, gamma=1.5, alpha=0.25)
        # rtol covers the ~2^-12 approx-reciprocal error on sigmoid.
        np.testing.assert_allclose(np.asarray(out), np.asarray(ref),
                                   rtol=2e-3, atol=1e-6)
        result = out

    jax.block_until_ready(result)
    print("KERNEL_OK")
</pallas_src>

<mosaic_0001>
module attributes {stable_mosaic.version = 11 : i64} {
  func.func @_qfocal_kernel(%arg0: i32, %arg1: i32, %arg2: memref<16x128xf32, #tpu.memory_space<vmem>>, %arg3: memref<16x128xf32, #tpu.memory_space<vmem>>, %arg4: memref<8x128xf32, #tpu.memory_space<vmem>>) attributes {dimension_semantics = [#tpu.dimension_semantics<parallel>, #tpu.dimension_semantics<arbitrary>], iteration_bounds = array<i64: 1, 1>, scalar_prefetch = 0 : i64, scratch_operands = 0 : i64, tpu.core_type = #tpu.core_type<tc>, window_params = [{transform_indices = @transform_0, window_bounds = array<i64: 16, 128>}, {transform_indices = @transform_1, window_bounds = array<i64: 16, 128>}, {transform_indices = @transform_2, window_bounds = array<i64: 8, 128>}]} {
    %c0_i32 = arith.constant 0 : i32
    %0 = arith.cmpi eq, %arg1, %c0_i32 : i32
    %1 = arith.extui %0 : i1 to i32
    %c0_i32_0 = arith.constant 0 : i32
    %2 = arith.cmpi ne, %1, %c0_i32_0 : i32
    scf.if %2 {
      %cst_15 = arith.constant 0.000000e+00 : f32
      %40 = vector.broadcast %cst_15 : f32 to vector<8x128xf32>
      %c0_16 = arith.constant 0 : index
      %c0_17 = arith.constant 0 : index
      %41 = vector.load %arg4[%c0_16, %c0_17] : memref<8x128xf32, #tpu.memory_space<vmem>>, vector<8x128xf32>
      tpu.vector_store %arg4[%c0_16, %c0_17], %40 {strides = array<i32>} : memref<8x128xf32, #tpu.memory_space<vmem>>, vector<8x128xf32>,
    } else {
    }
    %c0 = arith.constant 0 : index
    %c0_1 = arith.constant 0 : index
    %3 = vector.load %arg2[%c0, %c0_1] : memref<16x128xf32, #tpu.memory_space<vmem>>, vector<16x128xf32>
    %c0_2 = arith.constant 0 : index
    %c0_3 = arith.constant 0 : index
    %4 = vector.load %arg3[%c0_2, %c0_3] : memref<16x128xf32, #tpu.memory_space<vmem>>, vector<16x128xf32>
    %5 = math.absf %3 : vector<16x128xf32>
    %cst = arith.constant 0.000000e+00 : f32
    %6 = vector.broadcast %cst : f32 to vector<16x128xf32>
    %7 = arith.subf %6, %5 : vector<16x128xf32>
    %8 = math.exp %7 : vector<16x128xf32>
    %cst_4 = arith.constant 1.000000e+00 : f32
    %9 = vector.broadcast %cst_4 : f32 to vector<16x128xf32>
    %10 = arith.addf %9, %8 : vector<16x128xf32>
    %11 = tpu.reciprocal %10 {approx = true} : vector<16x128xf32> -> vector<16x128xf32>
    %cst_5 = arith.constant 0.000000e+00 : f32
    %12 = vector.broadcast %cst_5 : f32 to vector<16x128xf32>
    %13 = arith.cmpf oge, %3, %12 : vector<16x128xf32>
    %14 = arith.mulf %8, %11 : vector<16x128xf32>
    %15 = arith.select %13, %11, %14 : vector<16x128xi1>, vector<16x128xf32>
    %cst_6 = arith.constant 0.000000e+00 : f32
    %16 = vector.broadcast %cst_6 : f32 to vector<16x128xf32>
    %17 = arith.maximumf %3, %16 : vector<16x128xf32>
    %18 = arith.mulf %3, %4 : vector<16x128xf32>
    %19 = arith.subf %17, %18 : vector<16x128xf32>
    %20 = math.log1p %8 : vector<16x128xf32>
    %21 = arith.addf %19, %20 : vector<16x128xf32>
    %cst_7 = arith.constant 2.500000e-01 : f32
    %22 = vector.broadcast %cst_7 : f32 to vector<16x128xf32>
    %23 = arith.mulf %4, %22 : vector<16x128xf32>
    %cst_8 = arith.constant 1.000000e+00 : f32
    %24 = vector.broadcast %cst_8 : f32 to vector<16x128xf32>
    %25 = arith.subf %24, %4 : vector<16x128xf32>
    %cst_9 = arith.constant 7.500000e-01 : f32
    %26 = vector.broadcast %cst_9 : f32 to vector<16x128xf32>
    %27 = arith.mulf %25, %26 : vector<16x128xf32>
    %28 = arith.addf %23, %27 : vector<16x128xf32>
    %29 = arith.subf %4, %15 : vector<16x128xf32>
    %30 = math.absf %29 : vector<16x128xf32>
    %31 = math.sqrt %30 : vector<16x128xf32>
    %32 = arith.mulf %30, %31 : vector<16x128xf32>
    %33 = arith.mulf %21, %28 : vector<16x128xf32>
    %34 = arith.mulf %33, %32 : vector<16x128xf32>
    %c0_10 = arith.constant 0 : index
    %c0_11 = arith.constant 0 : index
    %35 = vector.load %arg4[%c0_10, %c0_11] : memref<8x128xf32, #tpu.memory_space<vmem>>, vector<8x128xf32>
    %36 = vector.shape_cast %34 : vector<16x128xf32> to vector<2x8x128xf32>
    %cst_12 = arith.constant dense<0.000000e+00> : vector<8x128xf32>
    %37 = vector.multi_reduction <add>, %36, %cst_12 [0] : vector<2x8x128xf32> to vector<8x128xf32>
    %38 = arith.addf %35, %37 : vector<8x128xf32>
    %c0_13 = arith.constant 0 : index
    %c0_14 = arith.constant 0 : index
    %39 = vector.load %arg4[%c0_13, %c0_14] : memref<8x128xf32, #tpu.memory_space<vmem>>, vector<8x128xf32>
    tpu.vector_store %arg4[%c0_13, %c0_14], %38 {strides = array<i32>} : memref<8x128xf32, #tpu.memory_space<vmem>>, vector<8x128xf32>,
    return
  }
  func.func @transform_0(%arg0: i32, %arg1: i32) -> (i32, i32) {
    %c1_i32 = arith.constant 1 : i32
    %0 = arith.muli %arg0, %c1_i32 : i32
    %1 = arith.addi %0, %arg1 : i32
    %c0_i32 = arith.constant 0 : i32
    %2 = arith.minsi %1, %c0_i32 : i32
    %c0_i32_0 = arith.constant 0 : i32
    %c0_i32_1 = arith.constant 0 : i32
    return %2, %c0_i32_0 : i32, i32
  }
  func.func @transform_1(%arg0: i32, %arg1: i32) -> (i32, i32) {
    %c1_i32 = arith.constant 1 : i32
    %0 = arith.muli %arg0, %c1_i32 : i32
    %1 = arith.addi %0, %arg1 : i32
    %c0_i32 = arith.constant 0 : i32
    %2 = arith.minsi %1, %c0_i32 : i32
    %c0_i32_0 = arith.constant 0 : i32
    %c0_i32_1 = arith.constant 0 : i32
    return %2, %c0_i32_0 : i32, i32
  }
  func.func @transform_2(%arg0: i32, %arg1: i32) -> (i32, i32) {
    %c0_i32 = arith.constant 0 : i32
    %c0_i32_0 = arith.constant 0 : i32
    return %arg0, %c0_i32 : i32, i32
  }
}

</mosaic_0001>

<llo_original>
// kernel: tpu_custom_call.1
$region0: #{tpu_custom_call.1}
  #allocation0 [shape = 'u32[]', space=smem, size = 0x4, offset = 0x4, fixed_abs, tag = 'smem constant byte address 0x4 - core index']
  #allocation1 [shape = 'u32[72,128]{1,0:T(1,128)}', space=vmem, size = 0x9000, scoped, tag = 'internal scratch']
  %s0 = inlined_call_operand.hbm [shape: f32[16,128], index: 0, kind: input, shape index: {}]
  %s1 = inlined_call_operand.hbm [shape: f32[16,128], index: 1, kind: input, shape index: {}]
  %s2 = inlined_call_operand.hbm [shape: f32[8,128], index: 2, kind: output, shape index: {}]
  %s3 = sld [smem:[#allocation0]]
  $region30: #{tpu_custom_call.1} parent=0
    _
  %s5 = ssub.s32 1, %s3
  %s6 = scalar_select 0, %s5, %s3
  $region1: #{tpu_custom_call.1} parent=0
    #allocation2 [shape = 'u8[8192]{0}', space=vmem, size = 0x2000, scoped, tag = 'input window, operand 0, single buffered']
    #allocation3 [shape = 's32[1]{0}', space=sflag, size = 0x4, scoped, tag = 'scoped memory for tpu_custom_call.1']
    #allocation4 [shape = 's32[1]{0}', space=sflag, size = 0x4, scoped, tag = 'scoped memory for tpu_custom_call.1']
    #allocation5 [shape = 'u8[8192]{0}', space=vmem, size = 0x2000, scoped, tag = 'input window, operand 1, single buffered']
    #allocation6 [shape = 's32[1]{0}', space=sflag, size = 0x4, scoped, tag = 'scoped memory for tpu_custom_call.1']
    #allocation7 [shape = 'u8[4096]{0}', space=vmem, size = 0x1000, scoped, tag = 'output window, operand 0, single buffered']
    %7 = vsyncpa [#allocation3], 0
    %8 = vsyncpa [#allocation6], 0
    %9 = vsyncpa [#allocation4], 0
    // Predicated region
    $region2: #{tpu_custom_call.1} parent=1 // pred_check
      _
    $region3: #{tpu_custom_call.1} parent=1 // pred_check_branch
      %11 = sbr.rel (0) target = $region5
    $region4: #{tpu_custom_call.1} parent=1 // pred_region
      %s12 = sadd.s32 0, 0
      %p13 = scmp.lt.s32.totalorder %s12, 0
      %s14 = scalar_select %p13, %s12, 0
      %s15 = smul.u32 2, %s14
      %17 = vsyncadd [#allocation3], 0
      %s18 = smul.addr %s15, 8
      %s19 = scalar_lea.hbm %s0, %s18
      %s20 = sshll.u32 %s19, 4
      %s21 = int_to_ptr.hbm [resolvable:$true] %s20
      %s22 = sshll.u32 [#allocation2], 4
      %s23 = int_to_ptr.vmem [resolvable:$true] %s22
      %28 = dma.hbm_to_vmem [thread:$0]  %s21, 256, %s23, [#allocation3], 128, 128, 8
    $region5: #{tpu_custom_call.1} parent=1 // pred_fallthru
      _
    // Predicated region
    $region6: #{tpu_custom_call.1} parent=1 // pred_check
      _
    $region7: #{tpu_custom_call.1} parent=1 // pred_check_branch
      %30 = sbr.rel (0) target = $region9
    $region8: #{tpu_custom_call.1} parent=1 // pred_region
      %s31 = sadd.s32 0, 0
      %p32 = scmp.lt.s32.totalorder %s31, 0
      %s33 = scalar_select %p32, %s31, 0
      %s34 = smul.u32 2, %s33
      %36 = vsyncadd [#allocation6], 0
      %s37 = smul.addr %s34, 8
      %s38 = scalar_lea.hbm %s1, %s37
      %s39 = sshll.u32 %s38, 4
      %s40 = int_to_ptr.hbm [resolvable:$true] %s39
      %s41 = sshll.u32 [#allocation5], 4
      %s42 = int_to_ptr.vmem [resolvable:$true] %s41
      %47 = dma.hbm_to_vmem [thread:$0]  %s40, 256, %s42, [#allocation6], 128, 128, 8
    $region9: #{tpu_custom_call.1} parent=1 // pred_fallthru
      _
    // Predicated region
    $region10: #{tpu_custom_call.1} parent=1 // pred_check
      _
    $region11: #{tpu_custom_call.1} parent=1 // pred_check_branch
      %49 = sbr.rel (0) target = $region13
    $region12: #{tpu_custom_call.1} parent=1 // pred_region
      %51 = dma.done [#allocation3], 256
    $region13: #{tpu_custom_call.1} parent=1 // pred_fallthru
      _
    // Predicated region
    $region14: #{tpu_custom_call.1} parent=1 // pred_check
      _
    $region15: #{tpu_custom_call.1} parent=1 // pred_check_branch
      %53 = sbr.rel (0) target = $region17
    $region16: #{tpu_custom_call.1} parent=1 // pred_region
      %55 = dma.done [#allocation6], 256
    $region17: #{tpu_custom_call.1} parent=1 // pred_fallthru
      _
    %s56 = sadd.s32 0, 0
    %p57 = scmp.lt.s32.totalorder %s56, 0
    %s58 = scalar_select %p57, %s56, 0
    %s59 = smul.u32 2, %s58
    %s60 = sadd.s32 0, 0
    %p61 = scmp.lt.s32.totalorder %s60, 0
    %s62 = scalar_select %p61, %s60, 0
    %s63 = smul.u32 2, %s62
    %p64 = scmp.eq.s32.totalorder 0, 0
    // Predicated region
    $region18: #{tpu_custom_call.1} parent=1 // pred_check
      %p65 = pneg %p64
    $region19: #{tpu_custom_call.1} parent=1 // pred_check_branch
      %67 = sbr.rel (%p65) target = $region21
    $region20: #{tpu_custom_call.1} parent=1 // pred_region
      %68 = vst [vmem:[#allocation7] sm:$0xff] 0.0
    $region21: #{tpu_custom_call.1} parent=1 // pred_fallthru
      _
    %v69 = vld [vmem:[#allocation2] sm:$0xff]
    %v70 = vld [vmem:[#allocation2 + $0x8] sm:$0xff]
    %v71 = vld [vmem:[#allocation5] sm:$0xff]
    %v72 = vld [vmem:[#allocation5 + $0x8] sm:$0xff]
    %v73 = vand.u32 2147483647, %v69
    %v74 = vand.u32 2147483647, %v70
    %v75 = vsub.f32 0.0, %v73
    %v76 = vsub.f32 0.0, %v74
    %v77 = vmul.f32 %v75, 1.442695
    %v78 = vpow.pop %v77
    %v79 = vmul.f32 %v76, 1.442695
    %v80 = vpow.pop %v79
    %v81 = vadd.f32 %v78, 1.0
    %v82 = vadd.f32 %v80, 1.0
    %v83 = vrcp.pop %v81
    %v84 = vrcp.pop %v82
    %vm85 = vcmp.ge.f32.partialorder %v69, 0.0
    %vm86 = vcmp.ge.f32.partialorder %v70, 0.0
    %v87 = vmul.f32 %v78, %v83
    %v88 = vmul.f32 %v80, %v84
    %v89 = vsel %vm85, %v83, %v87
    %v90 = vsel %vm86, %v84, %v88
    %v91 = vmax.f32 %v69, 0.0
    %v92 = vmax.f32 %v70, 0.0
    %v93 = vmul.f32 %v69, %v71
    %v94 = vmul.f32 %v70, %v72
    %v95 = vsub.f32 %v91, %v93
    %v96 = vsub.f32 %v92, %v94
    %v97 = vadd.f32 %v78, 1.0
    %v98 = vlog2.pop %v97
    %v99 = vmul.f32 %v98, 0.6931472
    %v100 = vmul.f32 -0.5, %v78
    %v101 = vadd.f32 %v100, 1.0
    %v102 = vmul.f32 %v101, %v78
    %v103 = vand.u32 2147483647, %v78
    %vm104 = vcmp.lt.f32.partialorder %v103, 0.0004427343
    %v105 = vsel %vm104, %v102, %v99
    %v106 = vadd.f32 %v80, 1.0
    %v107 = vlog2.pop %v106
    %v108 = vmul.f32 %v107, 0.6931472
    %v109 = vmul.f32 -0.5, %v80
    %v110 = vadd.f32 %v109, 1.0
    %v111 = vmul.f32 %v110, %v80
    %v112 = vand.u32 2147483647, %v80
    %vm113 = vcmp.lt.f32.partialorder %v112, 0.0004427343
    %v114 = vsel %vm113, %v111, %v108
    %v115 = vadd.f32 %v95, %v105
    %v116 = vadd.f32 %v96, %v114
    %v117 = vmul.f32 %v71, 0.25
    %v118 = vmul.f32 %v72, 0.25
    %v119 = vsub.f32 1.0, %v71
    %v120 = vsub.f32 1.0, %v72
    %v121 = vmul.f32 %v119, 0.75
    %v122 = vmul.f32 %v120, 0.75
    %v123 = vadd.f32 %v117, %v121
    %v124 = vadd.f32 %v118, %v122
    %v125 = vsub.f32 %v71, %v89
    %v126 = vsub.f32 %v72, %v90
    %v127 = vand.u32 2147483647, %v125
    %v128 = vand.u32 2147483647, %v126
    %v129 = vrsqrt.pop %v127
    %v130 = vmul.f32 %v129, %v127
    %v131 = vmul.f32 %v130, %v129
    %v132 = vmul.f32 0.5, %v131
    %v133 = vsub.f32 1.5, %v132
    %v134 = vmul.f32 %v129, %v133
    %v135 = vmul.f32 %v127, %v134
    %vm136 = vcmp.eq.f32.partialorder %v127, inf
    %v137 = vsel %vm136, %v127, %v135
    %vm138 = vcmp.eq.f32.partialorder %v127, 0.0
    %v139 = vand.u32 %v127, 2147483648
    %v140 = vsel %vm138, %v139, %v137
    %v141 = vrsqrt.pop %v128
    %v142 = vmul.f32 %v141, %v128
    %v143 = vmul.f32 %v142, %v141
    %v144 = vmul.f32 0.5, %v143
    %v145 = vsub.f32 1.5, %v144
    %v146 = vmul.f32 %v141, %v145
    %v147 = vmul.f32 %v128, %v146
    %vm148 = vcmp.eq.f32.partialorder %v128, inf
    %v149 = vsel %vm148, %v128, %v147
    %vm150 = vcmp.eq.f32.partialorder %v128, 0.0
    %v151 = vand.u32 %v128, 2147483648
    %v152 = vsel %vm150, %v151, %v149
    %v153 = vmul.f32 %v127, %v140
    %v154 = vmul.f32 %v128, %v152
    %v155 = vmul.f32 %v115, %v123
    %v156 = vmul.f32 %v116, %v124
    %v157 = vmul.f32 %v155, %v153
    %v158 = vmul.f32 %v156, %v154
    %v159 = vld [vmem:[#allocation7] sm:$0xff]
    %v160 = vadd.f32 %v157, %v158
    %v161 = vadd.f32 %v159, %v160
    %162 = vst [vmem:[#allocation7] sm:$0xff] %v161
    // Predicated region
    $region22: #{tpu_custom_call.1} parent=1 // pred_check
      _
    $region23: #{tpu_custom_call.1} parent=1 // pred_check_branch
      %164 = sbr.rel (0) target = $region25
    $region24: #{tpu_custom_call.1} parent=1 // pred_region
      %166 = vsyncadd [#allocation4], 0
      %s168 = sshll.u32 [#allocation7], 4
      %s169 = int_to_ptr.vmem [resolvable:$true] %s168
      %s170 = sshll.u32 %s2, 4
      %s171 = int_to_ptr.hbm [resolvable:$true] %s170
      %173 = dma.vmem_to_hbm [thread:$0]  %s169, 128, %s171, [#allocation4]
    $region25: #{tpu_custom_call.1} parent=1 // pred_fallthru
      _
    // Predicated region
    $region26: #{tpu_custom_call.1} parent=1 // pred_check
      _
    $region27: #{tpu_custom_call.1} parent=1 // pred_check_branch
      %175 = sbr.rel (0) target = $region29
    $region28: #{tpu_custom_call.1} parent=1 // pred_region
      %177 = dma.done [#allocation4], 128
    $region29: #{tpu_custom_call.1} parent=1 // pred_fallthru
      _
    %178 = vsyncpa [#allocation3], 1
    %179 = vsyncpa [#allocation6], 1
    %180 = vsyncpa [#allocation4], 1

</llo_original>
